<compile_context>
chip_gen: v7x
topology: tpu7x:2x2x1
jax: 0.10.0
libtpu: 0.0.40
codegen_flags: <defaults>
</compile_context>

<pallas_src>
import functools
import math

import jax
import jax.numpy as jnp
from jax.experimental import pallas as pl
from jax.experimental.pallas import tpu as pltpu


LANE = 128        # TPU lane width; hidden/class dims padded to this
OUT_SUB = 16      # stored class rows (10 real classes padded to a sublane-multiple)
NEG_INF = -1e30   # bias for padded logit lanes (exp() underflows to exactly 0)
IN_DIM = 256      # 16 * 4 * 4 flattened conv features


def _mlp_logsoftmax_kernel(x_ref, w1_ref, b1_ref, w2_ref, b2_ref,
                           w3_ref, b3_ref, o_ref, *, compute_dtype):
    """Fused fc1+ReLU -> fc2+ReLU -> fc3 -> log_softmax for one batch tile.

    The output block is stored transposed, (classes, batch), so the HBM store
    is lane-dense over the batch (64 B/row) instead of 128 f32 lanes per row.
    """
    # Input arrives in its HBM dtype (f32). Cast to bf16 in-register (VPU has
    # huge slack under a mem-bound kernel) instead of a pre-pass over HBM.
    x = x_ref[...].astype(compute_dtype)                              # (TB, 256)

    # fc1 + ReLU  (padded cols of w1/b1 are 0 -> pad lanes stay exactly 0)
    h1 = jnp.dot(x, w1_ref[...], preferred_element_type=jnp.float32) + b1_ref[...]
    h1 = jnp.maximum(h1, 0.0).astype(compute_dtype)                   # (TB, 128)

    # fc2 + ReLU
    h2 = jnp.dot(h1, w2_ref[...], preferred_element_type=jnp.float32) + b2_ref[...]
    h2 = jnp.maximum(h2, 0.0).astype(compute_dtype)                   # (TB, 128)

    # fc3: padded logit lanes carry a -1e30 bias (zero weight columns), so
    # they never win the row max and exp() to exactly 0 in the sum below.
    logits = jnp.dot(h2, w3_ref[...], preferred_element_type=jnp.float32) + b3_ref[...]

    # numerically stable log_softmax along the class (lane) axis, in f32
    m = jnp.max(logits, axis=-1, keepdims=True)
    shifted = logits - m
    lse = jnp.log(jnp.sum(jnp.exp(shifted), axis=-1, keepdims=True))
    logp = shifted - lse                                              # (TB, 128) f32

    # (TB, 128) -> (128, TB) rides the idle XLU slot; keep only the first
    # OUT_SUB class rows so the store is a small, lane-dense f32 block.
    o_ref[...] = jnp.transpose(logp)[:OUT_SUB, :].astype(o_ref.dtype)


def _round_up(n, m):
    return ((n + m - 1) // m) * m


def _pad2d(a, shape, fill=0.0):
    return jnp.pad(a, [(0, shape[i] - a.shape[i]) for i in range(a.ndim)],
                   constant_values=fill)


def prepare_params(params, compute_dtype=jnp.bfloat16):
    """Pad params to lane-dense 128-wide tiles and cast weights to bf16.

    Hoisted out of the forward path: do this ONCE per set of weights.
    """
    return dict(
        w1=_pad2d(params["w1"], (IN_DIM, LANE)).astype(compute_dtype),  # (256,128)
        b1=_pad2d(params["b1"], (1, LANE)).astype(jnp.float32),         # zeros in pad
        w2=_pad2d(params["w2"], (LANE, LANE)).astype(compute_dtype),    # (128,128)
        b2=_pad2d(params["b2"], (1, LANE)).astype(jnp.float32),
        w3=_pad2d(params["w3"], (LANE, LANE)).astype(compute_dtype),    # (128,128)
        b3=_pad2d(params["b3"], (1, LANE), fill=NEG_INF).astype(jnp.float32),
    )


def _choose_tb(b_pad):
    """Batch-tile size: one tile for small/medium batches; otherwise
    128-multiple tiles capped at 2048, aiming for >=4 tiles so both v7x
    TensorCores get work (harmless on v5e/v6e)."""
    if b_pad <= 1024:
        return b_pad
    return min(2048, max(128, _round_up(-(-b_pad // 4), 128)))


def full_connect_forward(x, prep, *, tb=None):
    """x: (B, 256) float (f32 or bf16).  prep: output of prepare_params().

    Returns (B, 10) float32 log-probabilities.
    """
    B, D = x.shape
    assert D == IN_DIM, "fc1 expects 256 = 16*4*4 flattened features"

    # Pad the batch only to a sublane multiple of 8 (NOT to a multiple of TB);
    # the grid uses a ragged last tile instead of wasting HBM bandwidth.
    B_pad = _round_up(B, 8)
    xp = x if B_pad == B else jnp.pad(x, ((0, B_pad - B), (0, 0)))

    if tb is None:
        TB = _choose_tb(B_pad)
    else:
        TB = tb
        assert TB % 8 == 0, "tile must be a sublane multiple"
        assert TB >= B_pad or TB % 128 == 0, \
            "multi-tile grids need a 128-multiple tile for the lane-dense output"
    grid = (pl.cdiv(B_pad, TB),)

    cdt = jnp.dtype(prep["w1"].dtype)
    kernel = functools.partial(_mlp_logsoftmax_kernel, compute_dtype=cdt)

    # Advisory cost estimate (kernel is firmly HBM-bound: ~128 FLOP/byte).
    w_bytes = (IN_DIM * LANE + 2 * LANE * LANE) * cdt.itemsize + 3 * LANE * 4
    cost = pl.CostEstimate(
        flops=2 * B_pad * (IN_DIM * LANE + 2 * LANE * LANE),
        transcendentals=B_pad * LANE,
        bytes_accessed=B_pad * (IN_DIM * xp.dtype.itemsize + OUT_SUB * 4) + w_bytes,
    )

    out = pl.pallas_call(
        kernel,
        out_shape=jax.ShapeDtypeStruct((OUT_SUB, B_pad), jnp.float32),
        grid=grid,
        in_specs=[
            pl.BlockSpec((TB, IN_DIM), lambda i: (i, 0)),    # x: batch-tiled
            pl.BlockSpec((IN_DIM, LANE), lambda i: (0, 0)),  # weights/biases:
            pl.BlockSpec((1, LANE), lambda i: (0, 0)),       # constant index_map
            pl.BlockSpec((LANE, LANE), lambda i: (0, 0)),    # -> VMEM-resident
            pl.BlockSpec((1, LANE), lambda i: (0, 0)),       #    across grid steps
            pl.BlockSpec((LANE, LANE), lambda i: (0, 0)),
            pl.BlockSpec((1, LANE), lambda i: (0, 0)),
        ],
        out_specs=pl.BlockSpec((OUT_SUB, TB), lambda i: (0, i)),  # (classes, batch)
        compiler_params=pltpu.CompilerParams(
            dimension_semantics=("parallel",)),                   # megacore on v7x
        cost_estimate=cost,
    )(xp, prep["w1"], prep["b1"], prep["w2"], prep["b2"], prep["w3"], prep["b3"])

    # (classes, batch) -> (batch, classes); drop padded classes / batch rows.
    return out[:10, :B].T


def init_params(key):
    """nn.Linear default init: U(-1/sqrt(fan_in), +1/sqrt(fan_in)).
    Weights stored transposed relative to PyTorch: (in_features, out_features)."""
    dims = [(IN_DIM, 120), (120, 84), (84, 10)]
    params = {}
    keys = jax.random.split(key, 2 * len(dims))
    for i, (fan_in, fan_out) in enumerate(dims):
        bound = 1.0 / math.sqrt(fan_in)
        params[f"w{i + 1}"] = jax.random.uniform(
            keys[2 * i], (fan_in, fan_out),
            minval=-bound, maxval=bound, dtype=jnp.float32)
        params[f"b{i + 1}"] = jax.random.uniform(
            keys[2 * i + 1], (1, fan_out),
            minval=-bound, maxval=bound, dtype=jnp.float32)
    return params


def reference_forward(x, params, compute_dtype=jnp.float32):
    """Pure-JAX reference.  compute_dtype lets us mirror the kernel's bf16
    operand quantization (f32 accumulation) for a tight comparison."""
    c = lambda a: a.astype(compute_dtype)
    h1 = jnp.maximum(
        jnp.dot(c(x), c(params["w1"]), preferred_element_type=jnp.float32)
        + params["b1"], 0.0)
    h2 = jnp.maximum(
        jnp.dot(c(h1), c(params["w2"]), preferred_element_type=jnp.float32)
        + params["b2"], 0.0)
    logits = (jnp.dot(c(h2), c(params["w3"]), preferred_element_type=jnp.float32)
              + params["b3"])
    return jax.nn.log_softmax(logits, axis=1)


if __name__ == "__main__":
    key = jax.random.PRNGKey(0)
    pkey, xkey, xkey2 = jax.random.split(key, 3)
    params = init_params(pkey)
    prep = prepare_params(params)          # pad + bf16 cast hoisted, done once

    # --- small batch (single-tile path): 256 = 16*4*4 flattened conv features
    x = jax.random.normal(xkey, (8, IN_DIM), dtype=jnp.float32)
    out = jax.block_until_ready(full_connect_forward(x, prep))
    assert out.shape == (8, 10)
    assert bool(jnp.all(jnp.isfinite(out)))

    ref_bf16 = reference_forward(x, params, compute_dtype=jnp.bfloat16)
    assert jnp.allclose(out, ref_bf16, atol=2e-3, rtol=2e-3)
    ref_f32 = reference_forward(x, params, compute_dtype=jnp.float32)
    assert jnp.allclose(out, ref_f32, atol=5e-2, rtol=5e-2)

    # --- multi-tile + ragged-last-tile path (grid=2 via tb override), still small
    x2 = jax.random.normal(xkey2, (200, IN_DIM), dtype=jnp.float32)
    out2 = jax.block_until_ready(full_connect_forward(x2, prep, tb=128))
    assert out2.shape == (200, 10)
    assert bool(jnp.all(jnp.isfinite(out2)))
    ref2 = reference_forward(x2, params, compute_dtype=jnp.bfloat16)
    assert jnp.allclose(out2, ref2, atol=2e-3, rtol=2e-3)

    print("KERNEL_OK")
</pallas_src>

<mosaic_0001>
module attributes {stable_mosaic.version = 11 : i64} {
  func.func @_mlp_logsoftmax_kernel(%arg0: i32, %arg1: memref<8x256xf32, #tpu.memory_space<vmem>>, %arg2: memref<256x128xbf16, #tpu.memory_space<vmem>>, %arg3: memref<1x128xf32, #tpu.memory_space<vmem>>, %arg4: memref<128x128xbf16, #tpu.memory_space<vmem>>, %arg5: memref<1x128xf32, #tpu.memory_space<vmem>>, %arg6: memref<128x128xbf16, #tpu.memory_space<vmem>>, %arg7: memref<1x128xf32, #tpu.memory_space<vmem>>, %arg8: memref<16x8xf32, #tpu.memory_space<vmem>>) attributes {dimension_semantics = [#tpu.dimension_semantics<parallel>], iteration_bounds = array<i64: 1>, scalar_prefetch = 0 : i64, scratch_operands = 0 : i64, tpu.core_type = #tpu.core_type<tc>, window_params = [{transform_indices = @transform_0, window_bounds = array<i64: 8, 256>}, {pipeline_mode = #tpu.pipeline_mode<synchronous>, transform_indices = @transform_1, window_bounds = array<i64: 256, 128>}, {pipeline_mode = #tpu.pipeline_mode<synchronous>, transform_indices = @transform_2, window_bounds = array<i64: 1, 128>}, {pipeline_mode = #tpu.pipeline_mode<synchronous>, transform_indices = @transform_3, window_bounds = array<i64: 128, 128>}, {pipeline_mode = #tpu.pipeline_mode<synchronous>, transform_indices = @transform_4, window_bounds = array<i64: 1, 128>}, {pipeline_mode = #tpu.pipeline_mode<synchronous>, transform_indices = @transform_5, window_bounds = array<i64: 128, 128>}, {pipeline_mode = #tpu.pipeline_mode<synchronous>, transform_indices = @transform_6, window_bounds = array<i64: 1, 128>}, {transform_indices = @transform_7, window_bounds = array<i64: 16, 8>}]} {
    %c0 = arith.constant 0 : index
    %c0_0 = arith.constant 0 : index
    %0 = vector.load %arg1[%c0, %c0_0] : memref<8x256xf32, #tpu.memory_space<vmem>>, vector<8x256xf32>
    %1 = arith.truncf %0 : vector<8x256xf32> to vector<8x256xbf16>
    %c0_1 = arith.constant 0 : index
    %c0_2 = arith.constant 0 : index
    %2 = vector.load %arg2[%c0_1, %c0_2] : memref<256x128xbf16, #tpu.memory_space<vmem>>, vector<256x128xbf16>
    %cst = arith.constant dense<0.000000e+00> : vector<8x128xf32>
    %3 = tpu.matmul %1, %2, %cst {dimension_numbers = #tpu.dot_dimension_numbers<[1], [0], [0], [1], [0, 0, 1, 1], [], []>} : vector<8x256xbf16>, vector<256x128xbf16>, vector<8x128xf32> -> vector<8x128xf32>
    %c0_3 = arith.constant 0 : index
    %c0_4 = arith.constant 0 : index
    %4 = vector.load %arg3[%c0_3, %c0_4] : memref<1x128xf32, #tpu.memory_space<vmem>>, vector<1x128xf32>
    %5 = vector.broadcast %4 : vector<1x128xf32> to vector<8x128xf32>
    %6 = arith.addf %3, %5 : vector<8x128xf32>
    %cst_5 = arith.constant 0.000000e+00 : f32
    %7 = vector.broadcast %cst_5 : f32 to vector<8x128xf32>
    %8 = arith.maximumf %6, %7 : vector<8x128xf32>
    %9 = arith.truncf %8 : vector<8x128xf32> to vector<8x128xbf16>
    %c0_6 = arith.constant 0 : index
    %c0_7 = arith.constant 0 : index
    %10 = vector.load %arg4[%c0_6, %c0_7] : memref<128x128xbf16, #tpu.memory_space<vmem>>, vector<128x128xbf16>
    %cst_8 = arith.constant dense<0.000000e+00> : vector<8x128xf32>
    %11 = tpu.matmul %9, %10, %cst_8 {dimension_numbers = #tpu.dot_dimension_numbers<[1], [0], [0], [1], [0, 0, 1, 1], [], []>} : vector<8x128xbf16>, vector<128x128xbf16>, vector<8x128xf32> -> vector<8x128xf32>
    %c0_9 = arith.constant 0 : index
    %c0_10 = arith.constant 0 : index
    %12 = vector.load %arg5[%c0_9, %c0_10] : memref<1x128xf32, #tpu.memory_space<vmem>>, vector<1x128xf32>
    %13 = vector.broadcast %12 : vector<1x128xf32> to vector<8x128xf32>
    %14 = arith.addf %11, %13 : vector<8x128xf32>
    %cst_11 = arith.constant 0.000000e+00 : f32
    %15 = vector.broadcast %cst_11 : f32 to vector<8x128xf32>
    %16 = arith.maximumf %14, %15 : vector<8x128xf32>
    %17 = arith.truncf %16 : vector<8x128xf32> to vector<8x128xbf16>
    %c0_12 = arith.constant 0 : index
    %c0_13 = arith.constant 0 : index
    %18 = vector.load %arg6[%c0_12, %c0_13] : memref<128x128xbf16, #tpu.memory_space<vmem>>, vector<128x128xbf16>
    %cst_14 = arith.constant dense<0.000000e+00> : vector<8x128xf32>
    %19 = tpu.matmul %17, %18, %cst_14 {dimension_numbers = #tpu.dot_dimension_numbers<[1], [0], [0], [1], [0, 0, 1, 1], [], []>} : vector<8x128xbf16>, vector<128x128xbf16>, vector<8x128xf32> -> vector<8x128xf32>
    %c0_15 = arith.constant 0 : index
    %c0_16 = arith.constant 0 : index
    %20 = vector.load %arg7[%c0_15, %c0_16] : memref<1x128xf32, #tpu.memory_space<vmem>>, vector<1x128xf32>
    %21 = vector.broadcast %20 : vector<1x128xf32> to vector<8x128xf32>
    %22 = arith.addf %19, %21 : vector<8x128xf32>
    %cst_17 = arith.constant dense<0xFF800000> : vector<8xf32>
    %23 = vector.multi_reduction <maximumf>, %22, %cst_17 [1] : vector<8x128xf32> to vector<8xf32>
    %24 = vector.shape_cast %23 : vector<8xf32> to vector<8x1xf32>
    %25 = vector.broadcast %24 : vector<8x1xf32> to vector<8x128xf32>
    %26 = arith.subf %22, %25 : vector<8x128xf32>
    %27 = math.exp %26 : vector<8x128xf32>
    %cst_18 = arith.constant dense<0.000000e+00> : vector<8xf32>
    %28 = vector.multi_reduction <add>, %27, %cst_18 [1] : vector<8x128xf32> to vector<8xf32>
    %29 = vector.shape_cast %28 : vector<8xf32> to vector<8x1xf32>
    %30 = math.log %29 : vector<8x1xf32>
    %31 = vector.broadcast %30 : vector<8x1xf32> to vector<8x128xf32>
    %32 = arith.subf %26, %31 : vector<8x128xf32>
    %33 = tpu.transpose %32, [1, 0] : vector<8x128xf32> -> vector<128x8xf32>
    %34 = vector.extract_strided_slice %33 {offsets = [0, 0], sizes = [16, 8], strides = [1, 1]} : vector<128x8xf32> to vector<16x8xf32>
    %c0_19 = arith.constant 0 : index
    %c0_20 = arith.constant 0 : index
    %35 = vector.load %arg8[%c0_19, %c0_20] : memref<16x8xf32, #tpu.memory_space<vmem>>, vector<16x8xf32>
    tpu.vector_store %arg8[%c0_19, %c0_20], %34 {strides = array<i32>} : memref<16x8xf32, #tpu.memory_space<vmem>>, vector<16x8xf32>,
    return
  }
  func.func @transform_0(%arg0: i32) -> (i32, i32) {
    %c0_i32 = arith.constant 0 : i32
    %c0_i32_0 = arith.constant 0 : i32
    return %arg0, %c0_i32 : i32, i32
  }
  func.func @transform_1(%arg0: i32) -> (i32, i32) {
    %c0_i32 = arith.constant 0 : i32
    %c0_i32_0 = arith.constant 0 : i32
    %c0_i32_1 = arith.constant 0 : i32
    return %c0_i32, %c0_i32_0 : i32, i32
  }
  func.func @transform_2(%arg0: i32) -> (i32, i32) {
    %c0_i32 = arith.constant 0 : i32
    %c0_i32_0 = arith.constant 0 : i32
    %c0_i32_1 = arith.constant 0 : i32
    return %c0_i32, %c0_i32_0 : i32, i32
  }
  func.func @transform_3(%arg0: i32) -> (i32, i32) {
    %c0_i32 = arith.constant 0 : i32
    %c0_i32_0 = arith.constant 0 : i32
    %c0_i32_1 = arith.constant 0 : i32
    return %c0_i32, %c0_i32_0 : i32, i32
  }
  func.func @transform_4(%arg0: i32) -> (i32, i32) {
    %c0_i32 = arith.constant 0 : i32
    %c0_i32_0 = arith.constant 0 : i32
    %c0_i32_1 = arith.constant 0 : i32
    return %c0_i32, %c0_i32_0 : i32, i32
  }
  func.func @transform_5(%arg0: i32) -> (i32, i32) {
    %c0_i32 = arith.constant 0 : i32
    %c0_i32_0 = arith.constant 0 : i32
    %c0_i32_1 = arith.constant 0 : i32
    return %c0_i32, %c0_i32_0 : i32, i32
  }
  func.func @transform_6(%arg0: i32) -> (i32, i32) {
    %c0_i32 = arith.constant 0 : i32
    %c0_i32_0 = arith.constant 0 : i32
    %c0_i32_1 = arith.constant 0 : i32
    return %c0_i32, %c0_i32_0 : i32, i32
  }
  func.func @transform_7(%arg0: i32) -> (i32, i32) {
    %c0_i32 = arith.constant 0 : i32
    %c0_i32_0 = arith.constant 0 : i32
    return %c0_i32, %arg0 : i32, i32
  }
}

</mosaic_0001>

<llo_original>
// kernel: tpu_custom_call.1
$region0: #{tpu_custom_call.1}
  #allocation0 [shape = 'u32[]', space=smem, size = 0x4, offset = 0x4, fixed_abs, tag = 'smem constant byte address 0x4 - core index']
  #allocation1 [shape = 'u32[144,128]{1,0:T(1,128)}', space=vmem, size = 0x12000, scoped, tag = 'internal scratch']
  %s0 = inlined_call_operand.hbm [shape: f32[8,256], index: 0, kind: input, shape index: {}]
  %s1 = inlined_call_operand.hbm [shape: bf16[256,128], index: 1, kind: input, shape index: {}]
  %s2 = inlined_call_operand.vmem [shape: f32[1,128], index: 2, kind: input, shape index: {}]
  %s3 = inlined_call_operand.hbm [shape: bf16[128,128], index: 3, kind: input, shape index: {}]
  %s4 = inlined_call_operand.vmem [shape: f32[1,128], index: 4, kind: input, shape index: {}]
  %s5 = inlined_call_operand.hbm [shape: bf16[128,128], index: 5, kind: input, shape index: {}]
  %s6 = inlined_call_operand.vmem [shape: f32[1,128], index: 6, kind: input, shape index: {}]
  %s7 = inlined_call_operand.vmem [shape: f32[16,8], index: 7, kind: output, shape index: {}]
  %s8 = sld [smem:[#allocation0]]
  $region54: #{tpu_custom_call.1} parent=0
    _
  %s10 = ssub.s32 1, %s8
  %s11 = scalar_select 0, %s10, %s8
  $region1: #{tpu_custom_call.1} parent=0
    #allocation2 [shape = 'u8[8192]{0}', space=vmem, size = 0x2000, scoped, tag = 'input window, operand 0, single buffered']
    #allocation3 [shape = 's32[1]{0}', space=sflag, size = 0x4, scoped, tag = 'scoped memory for tpu_custom_call.1']
    #allocation4 [shape = 'u8[65536]{0}', space=vmem, size = 0x10000, scoped, tag = 'input window, operand 1, single buffered']
    #allocation5 [shape = 's32[1]{0}', space=sflag, size = 0x4, scoped, tag = 'scoped memory for tpu_custom_call.1']
    #allocation6 [shape = 'u8[32768]{0}', space=vmem, size = 0x8000, scoped, tag = 'input window, operand 3, single buffered']
    #allocation7 [shape = 'u8[32768]{0}', space=vmem, size = 0x8000, scoped, tag = 'input window, operand 5, single buffered']
    #allocation8 [shape = 's32[1]{0}', space=sflag, size = 0x4, scoped, tag = 'scoped memory for tpu_custom_call.1']
    %12 = vsyncpa [#allocation3], 0
    %13 = vsyncpa [#allocation5], 0
    %14 = vsyncpa [#allocation8], 0
    // Predicated region
    $region2: #{tpu_custom_call.1} parent=1 // pred_check
      _
    $region3: #{tpu_custom_call.1} parent=1 // pred_check_branch
      %16 = sbr.rel (0) target = $region5
    $region4: #{tpu_custom_call.1} parent=1 // pred_region
      %s18 = ssub.s32 256, 256
      %19 = vsyncadd [#allocation3], %s18
      %s21 = sshll.u32 [#allocation2], 4
      %s22 = int_to_ptr.vmem [resolvable:$true] %s21
      %24 = dma.hbm_to_vmem [thread:$0]  %s0, 256, %s22, [#allocation3]
    $region5: #{tpu_custom_call.1} parent=1 // pred_fallthru
      _
    // Predicated region
    $region6: #{tpu_custom_call.1} parent=1 // pred_check
      _
    $region7: #{tpu_custom_call.1} parent=1 // pred_check_branch
      %26 = sbr.rel (0) target = $region9
    $region8: #{tpu_custom_call.1} parent=1 // pred_region
      %s28 = ssub.s32 2048, 2048
      %29 = vsyncadd [#allocation5], %s28
      %s30 = sshll.u32 [#allocation4], 4
      %s31 = int_to_ptr.vmem [resolvable:$true] %s30
      %36 = dma.hbm_to_vmem [thread:$0]  %s1, 2048, %s31, [#allocation5], 64, 64, 4
    $region9: #{tpu_custom_call.1} parent=1 // pred_fallthru
      _
    // Predicated region
    $region10: #{tpu_custom_call.1} parent=1 // pred_check
      _
    $region11: #{tpu_custom_call.1} parent=1 // pred_check_branch
      %38 = sbr.rel (0) target = $region13
    $region12: #{tpu_custom_call.1} parent=1 // pred_region
      _
    $region13: #{tpu_custom_call.1} parent=1 // pred_fallthru
      _
    // Predicated region
    $region14: #{tpu_custom_call.1} parent=1 // pred_check
      _
    $region15: #{tpu_custom_call.1} parent=1 // pred_check_branch
      %40 = sbr.rel (0) target = $region17
    $region16: #{tpu_custom_call.1} parent=1 // pred_region
      %s42 = ssub.s32 1024, 1024
      %43 = vsyncadd [#allocation5], %s42
      %s44 = sshll.u32 [#allocation6], 4
      %s45 = int_to_ptr.vmem [resolvable:$true] %s44
      %50 = dma.hbm_to_vmem [thread:$0]  %s3, 1024, %s45, [#allocation5], 64, 64, 4
    $region17: #{tpu_custom_call.1} parent=1 // pred_fallthru
      _
    // Predicated region
    $region18: #{tpu_custom_call.1} parent=1 // pred_check
      _
    $region19: #{tpu_custom_call.1} parent=1 // pred_check_branch
      %52 = sbr.rel (0) target = $region21
    $region20: #{tpu_custom_call.1} parent=1 // pred_region
      _
    $region21: #{tpu_custom_call.1} parent=1 // pred_fallthru
      _
    // Predicated region
    $region22: #{tpu_custom_call.1} parent=1 // pred_check
      _
    $region23: #{tpu_custom_call.1} parent=1 // pred_check_branch
      %54 = sbr.rel (0) target = $region25
    $region24: #{tpu_custom_call.1} parent=1 // pred_region
      %s56 = ssub.s32 1024, 1024
      %57 = vsyncadd [#allocation8], %s56
      %s58 = sshll.u32 [#allocation7], 4
      %s59 = int_to_ptr.vmem [resolvable:$true] %s58
      %64 = dma.hbm_to_vmem [thread:$0]  %s5, 1024, %s59, [#allocation8], 64, 64, 4
    $region25: #{tpu_custom_call.1} parent=1 // pred_fallthru
      _
    // Predicated region
    $region26: #{tpu_custom_call.1} parent=1 // pred_check
      _
    $region27: #{tpu_custom_call.1} parent=1 // pred_check_branch
      %66 = sbr.rel (0) target = $region29
    $region28: #{tpu_custom_call.1} parent=1 // pred_region
      _
    $region29: #{tpu_custom_call.1} parent=1 // pred_fallthru
      _
    // Predicated region
    $region30: #{tpu_custom_call.1} parent=1 // pred_check
      _
    $region31: #{tpu_custom_call.1} parent=1 // pred_check_branch
      %68 = sbr.rel (0) target = $region33
    $region32: #{tpu_custom_call.1} parent=1 // pred_region
      %69 = dma.done [#allocation3], 256
    $region33: #{tpu_custom_call.1} parent=1 // pred_fallthru
      _
    // Predicated region
    $region34: #{tpu_custom_call.1} parent=1 // pred_check
      _
    $region35: #{tpu_custom_call.1} parent=1 // pred_check_branch
      %71 = sbr.rel (0) target = $region37
    $region36: #{tpu_custom_call.1} parent=1 // pred_region
      %72 = dma.done [#allocation5], 2048
    $region37: #{tpu_custom_call.1} parent=1 // pred_fallthru
      _
    // Predicated region
    $region38: #{tpu_custom_call.1} parent=1 // pred_check
      _
    $region39: #{tpu_custom_call.1} parent=1 // pred_check_branch
      %74 = sbr.rel (0) target = $region41
    $region40: #{tpu_custom_call.1} parent=1 // pred_region
      %75 = dma.done [#allocation5], 1024
    $region41: #{tpu_custom_call.1} parent=1 // pred_fallthru
      _
    // Predicated region
    $region42: #{tpu_custom_call.1} parent=1 // pred_check
      _
    $region43: #{tpu_custom_call.1} parent=1 // pred_check_branch
      %77 = sbr.rel (0) target = $region45
    $region44: #{tpu_custom_call.1} parent=1 // pred_region
      %78 = dma.done [#allocation8], 1024
    $region45: #{tpu_custom_call.1} parent=1 // pred_fallthru
      _
    %v80 = vld [vmem:[#allocation2] sm:$0xff]
    %v81 = vld [vmem:[#allocation2 + $0x8] sm:$0xff]
    %v82 = vpack.c.bf16 %v80, %v80
    %v83 = vpack.c.bf16 %v81, %v81
    %v84 = vld [vmem:[#allocation4] sm:$0xf]
    %v85 = vld [vmem:[#allocation4 + $0x4] sm:$0xf]
    %v86 = vld [vmem:[#allocation4 + $0x8] sm:$0xf]
    %v87 = vld [vmem:[#allocation4 + $0xc] sm:$0xf]
    %v88 = vld [vmem:[#allocation4 + $0x10] sm:$0xf]
    %v89 = vld [vmem:[#allocation4 + $0x14] sm:$0xf]
    %v90 = vld [vmem:[#allocation4 + $0x18] sm:$0xf]
    %v91 = vld [vmem:[#allocation4 + $0x1c] sm:$0xf]
    %v92 = vld [vmem:[#allocation4 + $0x20] sm:$0xf]
    %v93 = vld [vmem:[#allocation4 + $0x24] sm:$0xf]
    %v94 = vld [vmem:[#allocation4 + $0x28] sm:$0xf]
    %v95 = vld [vmem:[#allocation4 + $0x2c] sm:$0xf]
    %v96 = vld [vmem:[#allocation4 + $0x30] sm:$0xf]
    %v97 = vld [vmem:[#allocation4 + $0x34] sm:$0xf]
    %v98 = vld [vmem:[#allocation4 + $0x38] sm:$0xf]
    %v99 = vld [vmem:[#allocation4 + $0x3c] sm:$0xf]
    %v100 = vld [vmem:[#allocation4 + $0x40] sm:$0xf]
    %v101 = vld [vmem:[#allocation4 + $0x44] sm:$0xf]
    %v102 = vld [vmem:[#allocation4 + $0x48] sm:$0xf]
    %v103 = vld [vmem:[#allocation4 + $0x4c] sm:$0xf]
    %v104 = vld [vmem:[#allocation4 + $0x50] sm:$0xf]
    %v105 = vld [vmem:[#allocation4 + $0x54] sm:$0xf]
    %v106 = vld [vmem:[#allocation4 + $0x58] sm:$0xf]
    %v107 = vld [vmem:[#allocation4 + $0x5c] sm:$0xf]
    %v108 = vld [vmem:[#allocation4 + $0x60] sm:$0xf]
    %v109 = vld [vmem:[#allocation4 + $0x64] sm:$0xf]
    %v110 = vld [vmem:[#allocation4 + $0x68] sm:$0xf]
    %v111 = vld [vmem:[#allocation4 + $0x6c] sm:$0xf]
    %v112 = vld [vmem:[#allocation4 + $0x70] sm:$0xf]
    %v113 = vld [vmem:[#allocation4 + $0x74] sm:$0xf]
    %v114 = vld [vmem:[#allocation4 + $0x78] sm:$0xf]
    %v115 = vld [vmem:[#allocation4 + $0x7c] sm:$0xf]
    %v116 = vld [vmem:[%s2] sm:$0x1]
    %v118 = vlaneseq
    %v119 = vshrl.u32 %v118, 7
    %v120 = vsub.s32 0, %v119
    %v121 = vrot.slane %v116, %v120
    %v155 = vunpack.c.l.b16 %v84
    %v156 = vunpack.c.l.b16 %v85
    %v157 = vunpack.c.l.b16 %v86
    %v158 = vunpack.c.l.b16 %v87
    %v159 = vunpack.c.l.b16 %v88
    %v160 = vunpack.c.l.b16 %v89
    %v161 = vunpack.c.l.b16 %v90
    %v162 = vunpack.c.l.b16 %v91
    %v163 = vunpack.c.l.b16 %v92
    %v164 = vunpack.c.l.b16 %v93
    %v165 = vunpack.c.l.b16 %v94
    %v166 = vunpack.c.l.b16 %v95
    %v167 = vunpack.c.l.b16 %v96
    %v168 = vunpack.c.l.b16 %v97
    %v169 = vunpack.c.l.b16 %v98
    %v170 = vunpack.c.l.b16 %v99
    %v171 = vunpack.c.l.b16 %v100
    %v172 = vunpack.c.l.b16 %v101
    %v173 = vunpack.c.l.b16 %v102
    %v174 = vunpack.c.l.b16 %v103
    %v175 = vunpack.c.l.b16 %v104
    %v176 = vunpack.c.l.b16 %v105
    %v177 = vunpack.c.l.b16 %v106
    %v178 = vunpack.c.l.b16 %v107
    %v179 = vunpack.c.l.b16 %v108
    %v180 = vunpack.c.l.b16 %v109
    %v181 = vunpack.c.l.b16 %v110
    %v182 = vunpack.c.l.b16 %v111
    %v183 = vunpack.c.l.b16 %v112
    %v184 = vunpack.c.l.b16 %v113
    %v185 = vunpack.c.l.b16 %v114
    %v186 = vunpack.c.l.b16 %v115
    %v187 = vpack.c.b16 %v156, %v155
    %v188 = vpack.c.b16 %v158, %v157
    %v189 = vpack.c.b16 %v160, %v159
    %v190 = vpack.c.b16 %v162, %v161
    %v191 = vpack.c.b16 %v164, %v163
    %v192 = vpack.c.b16 %v166, %v165
    %v193 = vpack.c.b16 %v168, %v167
    %v194 = vpack.c.b16 %v170, %v169
    %v195 = vpack.c.b16 %v172, %v171
    %v196 = vpack.c.b16 %v174, %v173
    %v197 = vpack.c.b16 %v176, %v175
    %v198 = vpack.c.b16 %v178, %v177
    %v199 = vpack.c.b16 %v180, %v179
    %v200 = vpack.c.b16 %v182, %v181
    %v201 = vpack.c.b16 %v184, %v183
    %v202 = vpack.c.b16 %v186, %v185
    %219 = vmatprep.subr.bf16.mxu0 0
    %220 = vmatpush1.bf16.msra.mxu0 %v187
    %221 = vmatprep.subr.bf16.mxu0 0
    %222 = vmatpush1.bf16.msra.mxu0 %v188
    %223 = vmatprep.subr.bf16.mxu0 0
    %224 = vmatpush1.bf16.msra.mxu0 %v189
    %225 = vmatprep.subr.bf16.mxu0 0
    %226 = vmatpush1.bf16.msra.mxu0 %v190
    %227 = vmatprep.subr.bf16.mxu0 0
    %228 = vmatpush1.bf16.msra.mxu0 %v191
    %229 = vmatprep.subr.bf16.mxu0 0
    %230 = vmatpush1.bf16.msra.mxu0 %v192
    %231 = vmatprep.subr.bf16.mxu0 0
    %232 = vmatpush1.bf16.msra.mxu0 %v193
    %233 = vmatprep.subr.bf16.mxu0 0
    %234 = vmatpush1.bf16.msra.mxu0 %v194
    %235 = vmatprep.subr.bf16.mxu0 0
    %236 = vmatpush1.bf16.msra.mxu0 %v195
    %237 = vmatprep.subr.bf16.mxu0 0
    %238 = vmatpush1.bf16.msra.mxu0 %v196
    %239 = vmatprep.subr.bf16.mxu0 0
    %240 = vmatpush1.bf16.msra.mxu0 %v197
    %241 = vmatprep.subr.bf16.mxu0 0
    %242 = vmatpush1.bf16.msra.mxu0 %v198
    %243 = vmatprep.subr.bf16.mxu0 0
    %244 = vmatpush1.bf16.msra.mxu0 %v199
    %245 = vmatprep.subr.bf16.mxu0 0
    %246 = vmatpush1.bf16.msra.mxu0 %v200
    %247 = vmatprep.subr.bf16.mxu0 0
    %248 = vmatpush1.bf16.msra.mxu0 %v201
    %249 = vmatprep.subr.bf16.mxu0 0
    %250 = vmatpush1.bf16.msra.mxu0 %v202
    %251 = vmatprep.mubr.bf16.mxu0 %v83
    %252 = vmatmul.mubr.bf16.gmra.mrb[0].mxu0 %v82
    %v253 = vpop.f32.mrb[0].mxu0
    %v254 = vadd.f32 %v121, %v253
    %v255 = vpop.f32.mrb[0].mxu0
    %v256 = vpop.f32.mrb[0].mxu0
    %v257 = vpop.f32.mrb[0].mxu0
    %258 = vdwg.mxu0
    %v259 = vmax.f32 %v254, 0.0
    %v260 = vpack.c.bf16 %v259, %v259
    %v261 = vld [vmem:[#allocation6] sm:$0xf]
    %v262 = vld [vmem:[#allocation6 + $0x4] sm:$0xf]
    %v263 = vld [vmem:[#allocation6 + $0x8] sm:$0xf]
    %v264 = vld [vmem:[#allocation6 + $0xc] sm:$0xf]
    %v265 = vld [vmem:[#allocation6 + $0x10] sm:$0xf]
    %v266 = vld [vmem:[#allocation6 + $0x14] sm:$0xf]
    %v267 = vld [vmem:[#allocation6 + $0x18] sm:$0xf]
    %v268 = vld [vmem:[#allocation6 + $0x1c] sm:$0xf]
    %v269 = vld [vmem:[#allocation6 + $0x20] sm:$0xf]
    %v270 = vld [vmem:[#allocation6 + $0x24] sm:$0xf]
    %v271 = vld [vmem:[#allocation6 + $0x28] sm:$0xf]
    %v272 = vld [vmem:[#allocation6 + $0x2c] sm:$0xf]
    %v273 = vld [vmem:[#allocation6 + $0x30] sm:$0xf]
    %v274 = vld [vmem:[#allocation6 + $0x34] sm:$0xf]
    %v275 = vld [vmem:[#allocation6 + $0x38] sm:$0xf]
    %v276 = vld [vmem:[#allocation6 + $0x3c] sm:$0xf]
    %v277 = vld [vmem:[%s4] sm:$0x1]
    %v279 = vlaneseq
    %v280 = vshrl.u32 %v279, 7
    %v281 = vsub.s32 0, %v280
    %v282 = vrot.slane %v277, %v281
    %v300 = vunpack.c.l.b16 %v261
    %v301 = vunpack.c.l.b16 %v262
    %v302 = vunpack.c.l.b16 %v263
    %v303 = vunpack.c.l.b16 %v264
    %v304 = vunpack.c.l.b16 %v265
    %v305 = vunpack.c.l.b16 %v266
    %v306 = vunpack.c.l.b16 %v267
    %v307 = vunpack.c.l.b16 %v268
    %v308 = vunpack.c.l.b16 %v269
    %v309 = vunpack.c.l.b16 %v270
    %v310 = vunpack.c.l.b16 %v271
    %v311 = vunpack.c.l.b16 %v272
    %v312 = vunpack.c.l.b16 %v273
    %v313 = vunpack.c.l.b16 %v274
    %v314 = vunpack.c.l.b16 %v275
    %v315 = vunpack.c.l.b16 %v276
    %v316 = vpack.c.b16 %v301, %v300
    %v317 = vpack.c.b16 %v303, %v302
    %v318 = vpack.c.b16 %v305, %v304
    %v319 = vpack.c.b16 %v307, %v306
    %v320 = vpack.c.b16 %v309, %v308
    %v321 = vpack.c.b16 %v311, %v310
    %v322 = vpack.c.b16 %v313, %v312
    %v323 = vpack.c.b16 %v315, %v314
    %332 = vmatprep.subr.bf16.mxu0 0
    %333 = vmatpush1.bf16.msra.mxu0 %v316
    %334 = vmatprep.subr.bf16.mxu0 0
    %335 = vmatpush1.bf16.msra.mxu0 %v317
    %336 = vmatprep.subr.bf16.mxu0 0
    %337 = vmatpush1.bf16.msra.mxu0 %v318
    %338 = vmatprep.subr.bf16.mxu0 0
    %339 = vmatpush1.bf16.msra.mxu0 %v319
    %340 = vmatprep.subr.bf16.mxu0 0
    %341 = vmatpush1.bf16.msra.mxu0 %v320
    %342 = vmatprep.subr.bf16.mxu0 0
    %343 = vmatpush1.bf16.msra.mxu0 %v321
    %344 = vmatprep.subr.bf16.mxu0 0
    %345 = vmatpush1.bf16.msra.mxu0 %v322
    %346 = vmatprep.subr.bf16.mxu0 0
    %347 = vmatpush1.bf16.msra.mxu0 %v323
    %348 = vmatprep.subr.bf16.mxu0 0
    %349 = vmatpush1.bf16.msra.mxu0 0
    %350 = vmatprep.subr.bf16.mxu0 0
    %351 = vmatpush1.bf16.msra.mxu0 0
    %352 = vmatprep.subr.bf16.mxu0 0
    %353 = vmatpush1.bf16.msra.mxu0 0
    %354 = vmatprep.subr.bf16.mxu0 0
    %355 = vmatpush1.bf16.msra.mxu0 0
    %356 = vmatprep.subr.bf16.mxu0 0
    %357 = vmatpush1.bf16.msra.mxu0 0
    %358 = vmatprep.subr.bf16.mxu0 0
    %359 = vmatpush1.bf16.msra.mxu0 0
    %360 = vmatprep.subr.bf16.mxu0 0
    %361 = vmatpush1.bf16.msra.mxu0 0
    %362 = vmatprep.subr.bf16.mxu0 0
    %363 = vmatpush1.bf16.msra.mxu0 0
    %364 = vmatprep.mubr.bf16.mxu0 0
    %365 = vmatmul.mubr.bf16.gmra.mrb[0].mxu0 %v260
    %v366 = vpop.f32.mrb[0].mxu0
    %v367 = vadd.f32 %v282, %v366
    %v368 = vpop.f32.mrb[0].mxu0
    %v369 = vpop.f32.mrb[0].mxu0
    %v370 = vpop.f32.mrb[0].mxu0
    %371 = vdwg.mxu0
    %v372 = vmax.f32 %v367, 0.0
    %v373 = vpack.c.bf16 %v372, %v372
    %v374 = vld [vmem:[#allocation7] sm:$0xf]
    %v375 = vld [vmem:[#allocation7 + $0x4] sm:$0xf]
    %v376 = vld [vmem:[#allocation7 + $0x8] sm:$0xf]
    %v377 = vld [vmem:[#allocation7 + $0xc] sm:$0xf]
    %v378 = vld [vmem:[#allocation7 + $0x10] sm:$0xf]
    %v379 = vld [vmem:[#allocation7 + $0x14] sm:$0xf]
    %v380 = vld [vmem:[#allocation7 + $0x18] sm:$0xf]
    %v381 = vld [vmem:[#allocation7 + $0x1c] sm:$0xf]
    %v382 = vld [vmem:[#allocation7 + $0x20] sm:$0xf]
    %v383 = vld [vmem:[#allocation7 + $0x24] sm:$0xf]
    %v384 = vld [vmem:[#allocation7 + $0x28] sm:$0xf]
    %v385 = vld [vmem:[#allocation7 + $0x2c] sm:$0xf]
    %v386 = vld [vmem:[#allocation7 + $0x30] sm:$0xf]
    %v387 = vld [vmem:[#allocation7 + $0x34] sm:$0xf]
    %v388 = vld [vmem:[#allocation7 + $0x38] sm:$0xf]
    %v389 = vld [vmem:[#allocation7 + $0x3c] sm:$0xf]
    %v390 = vld [vmem:[%s6] sm:$0x1]
    %v392 = vlaneseq
    %v393 = vshrl.u32 %v392, 7
    %v394 = vsub.s32 0, %v393
    %v395 = vrot.slane %v390, %v394
    %v413 = vunpack.c.l.b16 %v374
    %v414 = vunpack.c.l.b16 %v375
    %v415 = vunpack.c.l.b16 %v376
    %v416 = vunpack.c.l.b16 %v377
    %v417 = vunpack.c.l.b16 %v378
    %v418 = vunpack.c.l.b16 %v379
    %v419 = vunpack.c.l.b16 %v380
    %v420 = vunpack.c.l.b16 %v381
    %v421 = vunpack.c.l.b16 %v382
    %v422 = vunpack.c.l.b16 %v383
    %v423 = vunpack.c.l.b16 %v384
    %v424 = vunpack.c.l.b16 %v385
    %v425 = vunpack.c.l.b16 %v386
    %v426 = vunpack.c.l.b16 %v387
    %v427 = vunpack.c.l.b16 %v388
    %v428 = vunpack.c.l.b16 %v389
    %v429 = vpack.c.b16 %v414, %v413
    %v430 = vpack.c.b16 %v416, %v415
    %v431 = vpack.c.b16 %v418, %v417
    %v432 = vpack.c.b16 %v420, %v419
    %v433 = vpack.c.b16 %v422, %v421
    %v434 = vpack.c.b16 %v424, %v423
    %v435 = vpack.c.b16 %v426, %v425
    %v436 = vpack.c.b16 %v428, %v427
    %445 = vmatprep.subr.bf16.mxu0 0
    %446 = vmatpush1.bf16.msra.mxu0 %v429
    %447 = vmatprep.subr.bf16.mxu0 0
    %448 = vmatpush1.bf16.msra.mxu0 %v430
    %449 = vmatprep.subr.bf16.mxu0 0
    %450 = vmatpush1.bf16.msra.mxu0 %v431
    %451 = vmatprep.subr.bf16.mxu0 0
    %452 = vmatpush1.bf16.msra.mxu0 %v432
    %453 = vmatprep.subr.bf16.mxu0 0
    %454 = vmatpush1.bf16.msra.mxu0 %v433
    %455 = vmatprep.subr.bf16.mxu0 0
    %456 = vmatpush1.bf16.msra.mxu0 %v434
    %457 = vmatprep.subr.bf16.mxu0 0
    %458 = vmatpush1.bf16.msra.mxu0 %v435
    %459 = vmatprep.subr.bf16.mxu0 0
    %460 = vmatpush1.bf16.msra.mxu0 %v436
    %461 = vmatprep.subr.bf16.mxu0 0
    %462 = vmatpush1.bf16.msra.mxu0 0
    %463 = vmatprep.subr.bf16.mxu0 0
    %464 = vmatpush1.bf16.msra.mxu0 0
    %465 = vmatprep.subr.bf16.mxu0 0
    %466 = vmatpush1.bf16.msra.mxu0 0
    %467 = vmatprep.subr.bf16.mxu0 0
    %468 = vmatpush1.bf16.msra.mxu0 0
    %469 = vmatprep.subr.bf16.mxu0 0
    %470 = vmatpush1.bf16.msra.mxu0 0
    %471 = vmatprep.subr.bf16.mxu0 0
    %472 = vmatpush1.bf16.msra.mxu0 0
    %473 = vmatprep.subr.bf16.mxu0 0
    %474 = vmatpush1.bf16.msra.mxu0 0
    %475 = vmatprep.subr.bf16.mxu0 0
    %476 = vmatpush1.bf16.msra.mxu0 0
    %477 = vmatprep.mubr.bf16.mxu0 0
    %478 = vmatmul.mubr.bf16.gmra.mrb[0].mxu0 %v373
    %v479 = vpop.f32.mrb[0].mxu0
    %v480 = vadd.f32 %v395, %v479
    %v481 = vpop.f32.mrb[0].mxu0
    %v482 = vpop.f32.mrb[0].mxu0
    %v483 = vpop.f32.mrb[0].mxu0
    %484 = vdwg.mxu0
    %485 = vmax.xlane.f32.xlu0 %v480
    %v486 = vpop.xlane.xlu0 %485
    %v487 = vsub.f32 %v480, %v486
    %v488 = vmul.f32 %v487, 1.442695
    %v489 = vpow.pop %v488
    %490 = vadd.xlane.f32.xlu0 %v489
    %v491 = vpop.xlane.xlu0 %490
    %v492 = vlog2.pop %v491
    %v493 = vmul.f32 %v492, 0.6931472
    %v494 = vsub.f32 %v487, %v493
    %495 = vxpose.xlu0.b32.start [1/16] %v494, 128
    %496 = vxpose.xlu0.b32.cont [2/16] 0.0, 128
    %497 = vxpose.xlu0.b32.cont [3/16] 0.0, 128
    %498 = vxpose.xlu0.b32.cont [4/16] 0.0, 128
    %499 = vxpose.xlu0.b32.cont [5/16] 0.0, 128
    %500 = vxpose.xlu0.b32.cont [6/16] 0.0, 128
    %501 = vxpose.xlu0.b32.cont [7/16] 0.0, 128
    %502 = vxpose.xlu0.b32.cont [8/16] 0.0, 128
    %503 = vxpose.xlu0.b32.cont [9/16] 0.0, 128
    %504 = vxpose.xlu0.b32.cont [10/16] 0.0, 128
    %505 = vxpose.xlu0.b32.cont [11/16] 0.0, 128
    %506 = vxpose.xlu0.b32.cont [12/16] 0.0, 128
    %507 = vxpose.xlu0.b32.cont [13/16] 0.0, 128
    %508 = vxpose.xlu0.b32.cont [14/16] 0.0, 128
    %509 = vxpose.xlu0.b32.cont [15/16] 0.0, 128
    %510 = vxpose.xlu0.b32.end [16/16] 0.0, 128
    %v511 = vpop.trf.xlu0
    %v512 = vpop.trf.xlu0
    %v513 = vpop.trf.xlu0
    %v514 = vpop.trf.xlu0
    %v515 = vpop.trf.xlu0
    %v516 = vpop.trf.xlu0
    %v517 = vpop.trf.xlu0
    %v518 = vpop.trf.xlu0
    %v519 = vpop.trf.xlu0
    %v520 = vpop.trf.xlu0
    %v521 = vpop.trf.xlu0
    %v522 = vpop.trf.xlu0
    %v523 = vpop.trf.xlu0
    %v524 = vpop.trf.xlu0
    %v525 = vpop.trf.xlu0
    %v526 = vpop.trf.xlu0
    %vm527 = vcmask 64512
    %528 = vst.msk [vmem:[%s7] sm:$0xff] %vm527, %v511
    %529 = vst.msk [vmem:[%s7 + $0x8] sm:$0xff] %vm527, %v512
    // Predicated region
    $region46: #{tpu_custom_call.1} parent=1 // pred_check
      _
    $region47: #{tpu_custom_call.1} parent=1 // pred_check_branch
      %531 = sbr.rel (0) target = $region49
    $region48: #{tpu_custom_call.1} parent=1 // pred_region
      _
    $region49: #{tpu_custom_call.1} parent=1 // pred_fallthru
      _
    // Predicated region
    $region50: #{tpu_custom_call.1} parent=1 // pred_check
      _
    $region51: #{tpu_custom_call.1} parent=1 // pred_check_branch
      %533 = sbr.rel (0) target = $region53
    $region52: #{tpu_custom_call.1} parent=1 // pred_region
      _
    $region53: #{tpu_custom_call.1} parent=1 // pred_fallthru
      _
    %534 = vsyncpa [#allocation3], 1
    %535 = vsyncpa [#allocation5], 1
    %536 = vsyncpa [#allocation8], 1

</llo_original>
